<compile_context>
chip_gen: v7x
topology: tpu7x:2x2x1
jax: 0.10.0
libtpu: 0.0.40
codegen_flags: <defaults>
</compile_context>

<pallas_src>
import functools

import jax
import jax.numpy as jnp
from jax import lax
from jax.experimental import pallas as pl
from jax.experimental.pallas import tpu as pltpu

EPS = 1e-5  # PyTorch nn.LayerNorm default


# ----------------------------------------------------------------------------
# Cached hardware queries / capability probes.
# ----------------------------------------------------------------------------
_VMEM_CAP_BYTES = None
_BUFFERED_ONE_OK = None


def _vmem_capacity_bytes():
    """Physical per-TensorCore VMEM (128 MiB v5e/v6e, 64 MiB v7x)."""
    global _VMEM_CAP_BYTES
    if _VMEM_CAP_BYTES is None:
        try:
            _VMEM_CAP_BYTES = int(pltpu.get_tpu_info().vmem_capacity_bytes)
        except Exception:
            _VMEM_CAP_BYTES = 64 * 1024 * 1024  # conservative fallback (v7x)
    return _VMEM_CAP_BYTES


def _num_tensorcores():
    """2 on v7x (megacore split matters), else 1."""
    try:
        if "v7" in jax.devices()[0].device_kind.lower():
            return 2
    except Exception:
        pass
    # v7x is the only current chip with < 100 MiB VMEM per TensorCore.
    return 2 if _vmem_capacity_bytes() < 100 * 1024 * 1024 else 1


def _buffered_one_supported():
    """Probe pl.Buffered(1) once on a tiny kernel so a genuine lowering error
    of the real kernel is never silently swallowed by a broad except."""
    global _BUFFERED_ONE_OK
    if _BUFFERED_ONE_OK is None:
        def _probe_kernel(x_ref, o_ref):
            o_ref[...] = x_ref[...]

        try:
            x = jnp.zeros((8, 128), jnp.float32)
            out = pl.pallas_call(
                _probe_kernel,
                out_shape=jax.ShapeDtypeStruct((16, 128), jnp.float32),
                grid=(2,),
                in_specs=[pl.BlockSpec((8, 128), lambda i: (0, 0),
                                       pipeline_mode=pl.Buffered(1))],
                out_specs=pl.BlockSpec((8, 128), lambda i: (i, 0)),
            )(x)
            jax.block_until_ready(out)
            _BUFFERED_ONE_OK = True
        except Exception:
            _BUFFERED_ONE_OK = False
    return _BUFFERED_ONE_OK


# ----------------------------------------------------------------------------
# Kernel.
# ----------------------------------------------------------------------------
def _make_add_norm_kernel(real_s, matmul_dtype):
    def kernel(x_ref, w_ref, b_ref, o_ref):
        # x_ref: (Bt, S_pad, H)  w_ref: (H, H) in matmul_dtype  b_ref: (1, H) f32
        bt, s, h = x_ref.shape
        x3 = x_ref[...]                       # native dtype, no upcast copy
        # Free re-view: S_pad is a multiple of the sublane pack.
        x2 = x3.reshape(bt * s, h)

        # sub_layer(x): one (Bt*S, H) x (H, H) MXU matmul; operands in
        # matmul_dtype (bf16 by default), accumulation in f32.
        sub = jnp.dot(x2.astype(matmul_dtype), w_ref[...],
                      preferred_element_type=jnp.float32)
        sub = sub + b_ref[...].astype(jnp.float32)

        # Residual add (dropout == identity at inference); LN math stays f32.
        # TODO(synk): training-mode dropout (p=config.p) omitted — inference semantics.
        y3 = (x2.astype(jnp.float32) + sub).reshape(bt, s, h)

        padded = real_s != s
        if padded:
            row = lax.broadcasted_iota(jnp.int32, (1, s, 1), 1)
            valid = row < real_s
            y3 = jnp.where(valid, y3, 0.0)

        # Per-sample LayerNorm over the (S, H) slab with fresh affine params
        # (weight=1, bias=0) -> pure normalization.  Two-pass centered variance
        # (matches the PyTorch reference; avoids E[y^2]-E[y]^2 cancellation).
        n = float(real_s * h)
        mean = jnp.sum(jnp.sum(y3, axis=2, keepdims=True),
                       axis=1, keepdims=True) / n            # (Bt, 1, 1)
        d = y3 - mean
        if padded:
            d = jnp.where(valid, d, 0.0)
        var = jnp.sum(jnp.sum(d * d, axis=2, keepdims=True),
                      axis=1, keepdims=True) / n
        inv = lax.rsqrt(var + EPS)
        o_ref[...] = (d * inv).astype(o_ref.dtype)

    return kernel


# ----------------------------------------------------------------------------
# Tiling choice (all static shape math).
# ----------------------------------------------------------------------------
def _choose_tiling(B, S_pad, H, x_bytes, mm_bytes, single_buffer_params,
                   multi_tc, vmem_limit):
    """Pick Bt (samples per grid step) and the padded number of grid blocks."""
    param_bufs = 1 if single_buffer_params else 2
    param_bytes = param_bufs * (H * H * mm_bytes + H * 4)      # weight + bias
    act_budget = max(vmem_limit - param_bytes - 2 * 1024 * 1024,
                     1 * 1024 * 1024)
    # Per-sample VMEM: double-buffered input + output slabs, the matmul-dtype
    # operand copy, and ~3 f32-slab temps (sub/y3 + the centered pass).
    per_sample = S_pad * H * (2 * x_bytes + 2 * x_bytes + mm_bytes + 3 * 4)
    bt_budget = max(1, act_budget // per_sample)

    # Feed the MXU 512-1024 rows per step (tile-sweep sweet spot on v5e/v6e).
    bt = max(1, 1024 // S_pad)
    bt = min(bt, B, bt_budget)

    if multi_tc and B >= 2:
        bt = min(bt, pl.cdiv(B, 2))          # >= 2 grid steps so both TCs work
    n_blocks = pl.cdiv(B, bt)
    if multi_tc and n_blocks > 1 and n_blocks % 2:
        n_blocks += 1                        # even split across the 2 TCs
    return bt, n_blocks


# ----------------------------------------------------------------------------
# pallas_call wrapper (jitted; Bt / padding derived from static shapes).
# ----------------------------------------------------------------------------
@functools.partial(jax.jit,
                   static_argnames=("matmul_dtype", "single_buffer_params"))
def _add_norm_impl(x, w, b, *, matmul_dtype, single_buffer_params):
    B, S, H = x.shape
    out_dtype = x.dtype
    mm_bytes = jnp.dtype(matmul_dtype).itemsize

    # Cast the sub_layer weight to the MXU dtype in the wrapper so both the
    # HBM->VMEM DMA and the resident VMEM copy are halved (binding constraint
    # on v7x's 64 MiB VMEM).  Bias stays f32 (added to the f32 accumulator).
    w_mm = w.astype(matmul_dtype)
    b2 = b.reshape(1, H).astype(jnp.float32)

    vmem_cap = _vmem_capacity_bytes()
    vmem_limit = min(int(vmem_cap * 3 // 4), 112 * 1024 * 1024)
    multi_tc = _num_tensorcores() > 1

    # Pad S to the sublane pack of x's dtype so the in-kernel collapse
    # (Bt,S,H)->(Bt*S,H) is a free re-view (no Mosaic re-tiling copy).
    pack = max(8, 32 // x.dtype.itemsize)
    S_pad = pl.cdiv(S, pack) * pack

    bt, n_blocks = _choose_tiling(B, S_pad, H, x.dtype.itemsize, mm_bytes,
                                  single_buffer_params, multi_tc, vmem_limit)
    B_pad = n_blocks * bt

    x_in = x
    if B_pad != B or S_pad != S:
        x_in = jnp.pad(x, ((0, B_pad - B), (0, S_pad - S), (0, 0)))

    def shared_spec(block_shape):
        index_map = lambda i: (0,) * len(block_shape)
        if single_buffer_params:
            # Grid-invariant operand: single-buffer to halve its VMEM cost.
            return pl.BlockSpec(block_shape, index_map,
                                pipeline_mode=pl.Buffered(1))
        return pl.BlockSpec(block_shape, index_map)

    cost = pl.CostEstimate(
        flops=2 * B_pad * S_pad * H * H + 10 * B_pad * S_pad * H,
        transcendentals=B_pad,
        bytes_accessed=(2 * B_pad * S_pad * H * x.dtype.itemsize
                        + H * H * mm_bytes + H * 4),
    )

    out = pl.pallas_call(
        _make_add_norm_kernel(S, matmul_dtype),
        out_shape=jax.ShapeDtypeStruct((B_pad, S_pad, H), out_dtype),
        grid_spec=pltpu.PrefetchScalarGridSpec(
            num_scalar_prefetch=0,
            grid=(n_blocks,),
            in_specs=[
                # H is the lane dim; real configs have H % 128 == 0 so stores
                # are lane-dense (the toy H=32 uses masked stores).
                pl.BlockSpec((bt, S_pad, H), lambda i: (i, 0, 0)),  # x slab
                shared_spec((H, H)),       # sub_layer weight (grid-invariant)
                shared_spec((1, H)),       # sub_layer bias   (grid-invariant)
            ],
            out_specs=pl.BlockSpec((bt, S_pad, H), lambda i: (i, 0, 0)),
        ),
        compiler_params=pltpu.CompilerParams(
            dimension_semantics=("parallel",),
            vmem_limit_bytes=vmem_limit,
        ),
        cost_estimate=cost,
    )(x_in, w_mm, b2)

    if B_pad != B or S_pad != S:
        out = out[:B, :S]
    return out


def add_norm(x, w, b, *, matmul_dtype=jnp.bfloat16):
    """x: (B, S, H), w: (H, H), b: (H,)  ->  (B, S, H).

    matmul_dtype: dtype of the sub_layer MXU matmul operands (accumulation is
    always f32).  bf16 by default (faster MXU + half the weight footprint);
    pass jnp.float32 for bit-tight math.
    """
    return _add_norm_impl(x, w, b,
                          matmul_dtype=jnp.dtype(matmul_dtype),
                          single_buffer_params=_buffered_one_supported())


def add_norm_ref(x, w, b):
    """Pure-JAX reference mirroring the PyTorch forward (eval-mode dropout)."""
    sub = jnp.einsum("bsh,hk->bsk", x.astype(jnp.float32),
                     w.astype(jnp.float32)) + b.astype(jnp.float32)
    y = x.astype(jnp.float32) + sub
    mean = jnp.mean(y, axis=(1, 2), keepdims=True)
    var = jnp.mean((y - mean) ** 2, axis=(1, 2), keepdims=True)
    return ((y - mean) * lax.rsqrt(var + EPS)).astype(x.dtype)


if __name__ == "__main__":
    B, S, H = 4, 8, 32

    key = jax.random.PRNGKey(0)
    kx, kw, kb = jax.random.split(key, 3)

    x = jax.random.normal(kx, (B, S, H), dtype=jnp.float32)
    # Deterministic sub_layer (Linear H->H) params, PyTorch-default-like range.
    w = jax.random.uniform(kw, (H, H), dtype=jnp.float32,
                           minval=-1.0 / (H ** 0.5), maxval=1.0 / (H ** 0.5))
    b = jax.random.uniform(kb, (H,), dtype=jnp.float32,
                           minval=-1.0 / (H ** 0.5), maxval=1.0 / (H ** 0.5))

    ref = add_norm_ref(x, w, b)

    # 1) f32-matmul path: verifies the kernel math bit-tightly.
    out_f32 = jax.block_until_ready(add_norm(x, w, b, matmul_dtype=jnp.float32))
    assert out_f32.shape == (B, S, H)
    assert jnp.allclose(out_f32, ref, atol=1e-4, rtol=1e-4)

    # 2) Default fast path: bf16 MXU operands, f32 accumulation.
    out_bf16 = jax.block_until_ready(add_norm(x, w, b))
    assert out_bf16.shape == (B, S, H)
    assert jnp.allclose(out_bf16, ref, atol=3e-2, rtol=3e-2)

    print("KERNEL_OK")
</pallas_src>

<mosaic_0001>
module attributes {stable_mosaic.version = 11 : i64} {
  func.func @_probe_kernel(%arg0: i32, %arg1: memref<8x128xf32, #tpu.memory_space<vmem>>, %arg2: memref<8x128xf32, #tpu.memory_space<vmem>>) attributes {dimension_semantics = [#tpu.dimension_semantics<arbitrary>], iteration_bounds = array<i64: 2>, scalar_prefetch = 0 : i64, scratch_operands = 0 : i64, tpu.core_type = #tpu.core_type<tc>, window_params = [{pipeline_mode = #tpu.pipeline_mode<synchronous>, transform_indices = @transform_0, window_bounds = array<i64: 8, 128>}, {transform_indices = @transform_1, window_bounds = array<i64: 8, 128>}]} {
    %c0 = arith.constant 0 : index
    %c0_0 = arith.constant 0 : index
    %0 = vector.load %arg1[%c0, %c0_0] : memref<8x128xf32, #tpu.memory_space<vmem>>, vector<8x128xf32>
    %c0_1 = arith.constant 0 : index
    %c0_2 = arith.constant 0 : index
    %1 = vector.load %arg2[%c0_1, %c0_2] : memref<8x128xf32, #tpu.memory_space<vmem>>, vector<8x128xf32>
    tpu.vector_store %arg2[%c0_1, %c0_2], %0 {strides = array<i32>} : memref<8x128xf32, #tpu.memory_space<vmem>>, vector<8x128xf32>,
    return
  }
  func.func @transform_0(%arg0: i32) -> (i32, i32) {
    %c0_i32 = arith.constant 0 : i32
    %c0_i32_0 = arith.constant 0 : i32
    %c0_i32_1 = arith.constant 0 : i32
    return %c0_i32, %c0_i32_0 : i32, i32
  }
  func.func @transform_1(%arg0: i32) -> (i32, i32) {
    %c0_i32 = arith.constant 0 : i32
    %c0_i32_0 = arith.constant 0 : i32
    return %arg0, %c0_i32 : i32, i32
  }
}

module attributes {stable_mosaic.version = 11 : i64} {
  func.func @kernel(%arg0: i32, %arg1: memref<2x8x32xf32, #tpu.memory_space<vmem>>, %arg2: memref<32x32xf32, #tpu.memory_space<vmem>>, %arg3: memref<1x32xf32, #tpu.memory_space<vmem>>, %arg4: memref<2x8x32xf32, #tpu.memory_space<vmem>>) attributes {dimension_semantics = [#tpu.dimension_semantics<parallel>], iteration_bounds = array<i64: 2>, scalar_prefetch = 0 : i64, scratch_operands = 0 : i64, tpu.core_type = #tpu.core_type<tc>, window_params = [{transform_indices = @transform_0, window_bounds = array<i64: 2, 8, 32>}, {pipeline_mode = #tpu.pipeline_mode<synchronous>, transform_indices = @transform_1, window_bounds = array<i64: 32, 32>}, {pipeline_mode = #tpu.pipeline_mode<synchronous>, transform_indices = @transform_2, window_bounds = array<i64: 1, 32>}, {transform_indices = @transform_3, window_bounds = array<i64: 2, 8, 32>}]} {
    %c0 = arith.constant 0 : index
    %c0_0 = arith.constant 0 : index
    %c0_1 = arith.constant 0 : index
    %0 = vector.load %arg1[%c0, %c0_0, %c0_1] : memref<2x8x32xf32, #tpu.memory_space<vmem>>, vector<2x8x32xf32>
    %1 = vector.shape_cast %0 : vector<2x8x32xf32> to vector<16x32xf32>
    %c0_2 = arith.constant 0 : index
    %c0_3 = arith.constant 0 : index
    %2 = vector.load %arg2[%c0_2, %c0_3] : memref<32x32xf32, #tpu.memory_space<vmem>>, vector<32x32xf32>
    %cst = arith.constant dense<0.000000e+00> : vector<16x32xf32>
    %3 = tpu.matmul %1, %2, %cst {dimension_numbers = #tpu.dot_dimension_numbers<[1], [0], [0], [1], [0, 0, 1, 1], [], []>} : vector<16x32xf32>, vector<32x32xf32>, vector<16x32xf32> -> vector<16x32xf32>
    %c0_4 = arith.constant 0 : index
    %c0_5 = arith.constant 0 : index
    %4 = vector.load %arg3[%c0_4, %c0_5] : memref<1x32xf32, #tpu.memory_space<vmem>>, vector<1x32xf32>
    %5 = vector.broadcast %4 : vector<1x32xf32> to vector<16x32xf32>
    %6 = arith.addf %3, %5 : vector<16x32xf32>
    %7 = arith.addf %1, %6 : vector<16x32xf32>
    %8 = vector.shape_cast %7 : vector<16x32xf32> to vector<2x8x32xf32>
    %cst_6 = arith.constant dense<0.000000e+00> : vector<2x8xf32>
    %9 = vector.multi_reduction <add>, %8, %cst_6 [2] : vector<2x8x32xf32> to vector<2x8xf32>
    %10 = vector.shape_cast %9 : vector<2x8xf32> to vector<2x8x1xf32>
    %cst_7 = arith.constant dense<0.000000e+00> : vector<2x1xf32>
    %11 = vector.multi_reduction <add>, %10, %cst_7 [1] : vector<2x8x1xf32> to vector<2x1xf32>
    %12 = vector.shape_cast %11 : vector<2x1xf32> to vector<2x1x1xf32>
    %cst_8 = arith.constant 2.560000e+02 : f32
    %13 = vector.broadcast %cst_8 : f32 to vector<2x1x1xf32>
    %14 = arith.divf %12, %13 : vector<2x1x1xf32>
    %15 = vector.broadcast %14 : vector<2x1x1xf32> to vector<2x8x32xf32>
    %16 = arith.subf %8, %15 : vector<2x8x32xf32>
    %17 = arith.mulf %16, %16 : vector<2x8x32xf32>
    %cst_9 = arith.constant dense<0.000000e+00> : vector<2x8xf32>
    %18 = vector.multi_reduction <add>, %17, %cst_9 [2] : vector<2x8x32xf32> to vector<2x8xf32>
    %19 = vector.shape_cast %18 : vector<2x8xf32> to vector<2x8x1xf32>
    %cst_10 = arith.constant dense<0.000000e+00> : vector<2x1xf32>
    %20 = vector.multi_reduction <add>, %19, %cst_10 [1] : vector<2x8x1xf32> to vector<2x1xf32>
    %21 = vector.shape_cast %20 : vector<2x1xf32> to vector<2x1x1xf32>
    %cst_11 = arith.constant 2.560000e+02 : f32
    %22 = vector.broadcast %cst_11 : f32 to vector<2x1x1xf32>
    %23 = arith.divf %21, %22 : vector<2x1x1xf32>
    %cst_12 = arith.constant 9.99999974E-6 : f32
    %24 = vector.broadcast %cst_12 : f32 to vector<2x1x1xf32>
    %25 = arith.addf %23, %24 : vector<2x1x1xf32>
    %26 = math.rsqrt %25 : vector<2x1x1xf32>
    %27 = vector.broadcast %26 : vector<2x1x1xf32> to vector<2x8x32xf32>
    %28 = arith.mulf %16, %27 : vector<2x8x32xf32>
    %c0_13 = arith.constant 0 : index
    %c0_14 = arith.constant 0 : index
    %c0_15 = arith.constant 0 : index
    %29 = vector.load %arg4[%c0_13, %c0_14, %c0_15] : memref<2x8x32xf32, #tpu.memory_space<vmem>>, vector<2x8x32xf32>
    tpu.vector_store %arg4[%c0_13, %c0_14, %c0_15], %28 {strides = array<i32>} : memref<2x8x32xf32, #tpu.memory_space<vmem>>, vector<2x8x32xf32>,
    return
  }
  func.func @transform_0(%arg0: i32) -> (i32, i32, i32) {
    %c0_i32 = arith.constant 0 : i32
    %c0_i32_0 = arith.constant 0 : i32
    %c0_i32_1 = arith.constant 0 : i32
    return %arg0, %c0_i32, %c0_i32_0 : i32, i32, i32
  }
  func.func @transform_1(%arg0: i32) -> (i32, i32) {
    %c0_i32 = arith.constant 0 : i32
    %c0_i32_0 = arith.constant 0 : i32
    %c0_i32_1 = arith.constant 0 : i32
    return %c0_i32, %c0_i32_0 : i32, i32
  }
  func.func @transform_2(%arg0: i32) -> (i32, i32) {
    %c0_i32 = arith.constant 0 : i32
    %c0_i32_0 = arith.constant 0 : i32
    %c0_i32_1 = arith.constant 0 : i32
    return %c0_i32, %c0_i32_0 : i32, i32
  }
  func.func @transform_3(%arg0: i32) -> (i32, i32, i32) {
    %c0_i32 = arith.constant 0 : i32
    %c0_i32_0 = arith.constant 0 : i32
    %c0_i32_1 = arith.constant 0 : i32
    return %arg0, %c0_i32, %c0_i32_0 : i32, i32, i32
  }
}

</mosaic_0001>

<llo_original>
// kernel: tpu_custom_call.1
$region0: #{tpu_custom_call.1}
  #allocation0 [shape = 'u32[]', space=smem, size = 0x4, offset = 0x4, fixed_abs, tag = 'smem constant byte address 0x4 - core index']
  #allocation1 [shape = 'u32[144,128]{1,0:T(1,128)}', space=vmem, size = 0x12000, scoped, tag = 'internal scratch']
  %s0 = inlined_call_operand.hbm [shape: f32[8,128], index: 0, kind: input, shape index: {}]
  %s1 = inlined_call_operand.hbm [shape: f32[16,128], index: 1, kind: output, shape index: {}]
  %s2 = sld [smem:[#allocation0]]
  $region41: #{tpu_custom_call.1} parent=0
    _
  %s4 = ssub.s32 1, %s2
  %s5 = scalar_select 0, %s4, %s2
  $region1: #{tpu_custom_call.1} parent=0
    #allocation2 [shape = 'u8[4096]{0}', space=vmem, size = 0x1000, scoped, tag = 'input window, operand 0, single buffered']
    #allocation3 [shape = 's32[2]{0}', space=sflag, size = 0x8, scoped, tag = 'scoped memory for tpu_custom_call.1']
    #allocation4 [shape = 's32[2]{0}', space=sflag, size = 0x8, scoped, tag = 'scoped memory for tpu_custom_call.1']
    #allocation5 [shape = 'u8[8192]{0}', space=vmem, size = 0x2000, scoped, tag = 'output window, operand 0']
    %6 = vsyncpa [#allocation3], 0
    %7 = vsyncpa [#allocation4], 0
    %s8 = scalar_lea.sflag [#allocation4], 1
    %9 = vsyncpa %s8, 0
    loop: start=0, step=1, limit=4
    $region2: #{tpu_custom_call.1} parent=1 // loop_pre_header
      _
    $region3: #{tpu_custom_call.1} parent=1 // loop_header
      %s11 = sphi 0, %s15
      %p12 = scmp.ge.s32.totalorder %s11, 4
      %s19 = sphi 0, %s19
      %s21 = sphi 0, %s19
      %s22 = sphi 0, %s21
      %s36 = sphi 0, %s22
      %s42 = sphi 0, %s44
      %s45 = sphi 0, %s42
      %s46 = sphi 0, %s45
      %s62 = sphi 0, %s46
    $region4: #{tpu_custom_call.1} parent=1 // loop_header_branch
      %14 = sbr.rel (%p12) target = $region8
    $region5: #{tpu_custom_call.1} parent=1 // loop_body
      %s16 = ssub.s32 %s11, 1
      %s17 = ssub.s32 %s11, 2
      %s18 = sadd.s32 %s11, 1
      %s20 = sadd.s32 %s19, 1
      %p23 = scmp.eq.s32.totalorder %s11, 1
      %p24 = scmp.ne.s32.totalorder %s19, %s21
      %p25 = scmp.eq.s32.totalorder %s11, 0
      %p26 = por %p24, %p25
      %p27 = scmp.ne.s32.totalorder %s19, %s21
      %p28 = scmp.eq.s32.totalorder %s16, 1
      %p29 = por %p27, %p28
      %p30 = scmp.ne.s32.totalorder %s21, %s22
      %p31 = scmp.eq.s32.totalorder %s16, 0
      %p32 = por %p30, %p31
      %p33 = scmp.ne.s32.totalorder %s21, %s22
      %p34 = scmp.eq.s32.totalorder %s17, 1
      %p35 = por %p33, %p34
      %p37 = scmp.ne.s32.totalorder %s22, %s36
      %p38 = scmp.eq.s32.totalorder %s17, 0
      %p39 = por %p37, %p38
      %s40 = ssub.s32 %s11, %s18
      %p41 = scmp.eq.s32.totalorder %s40, 0
      %s43 = sadd.s32 %s42, 1
      %s44 = scalar_select %p41, %s42, %s43
      %p47 = pneg %p41
      %p48 = scmp.eq.s32.totalorder %s11, 1
      %p49 = por %p47, %p48
      %p50 = scmp.ne.s32.totalorder %s42, %s45
      %p51 = scmp.eq.s32.totalorder %s11, 0
      %p52 = por %p50, %p51
      %p53 = scmp.ne.s32.totalorder %s42, %s45
      %p54 = scmp.eq.s32.totalorder %s16, 1
      %p55 = por %p53, %p54
      %p56 = scmp.ne.s32.totalorder %s45, %s46
      %p57 = scmp.eq.s32.totalorder %s16, 0
      %p58 = por %p56, %p57
      %p59 = scmp.ne.s32.totalorder %s45, %s46
      %p60 = scmp.eq.s32.totalorder %s17, 1
      %p61 = por %p59, %p60
      %p63 = scmp.ne.s32.totalorder %s46, %s62
      %p64 = scmp.eq.s32.totalorder %s17, 0
      %p65 = por %p63, %p64
      %p66 = scmp.le.s32.totalorder 1, %s11
      %p67 = scmp.lt.s32.totalorder %s11, 3
      %p68 = pnand %p66, %p67
      %p69 = pneg %p68
      // Predicated region
      $region9: #{tpu_custom_call.1} parent=5 // pred_check
        _
      $region10: #{tpu_custom_call.1} parent=5 // pred_check_branch
        %71 = sbr.rel (%p68) target = $region12
      $region11: #{tpu_custom_call.1} parent=5 // pred_region
        %s72 = ssub.s32 %s11, 1
        // Predicated region
        $region13: #{tpu_custom_call.1} parent=11 // pred_check
          %p73 = pneg %p32
        $region14: #{tpu_custom_call.1} parent=11 // pred_check_branch
          %75 = sbr.rel (%p73) target = $region16
        $region15: #{tpu_custom_call.1} parent=11 // pred_region
          %s77 = ssub.s32 128, 128
          %78 = vsyncadd [#allocation3], %s77
          %s80 = sshll.u32 [#allocation2], 4
          %s81 = int_to_ptr.vmem [resolvable:$true] %s80
          %83 = dma.hbm_to_vmem [thread:$0]  %s0, 128, %s81, [#allocation3]
        $region16: #{tpu_custom_call.1} parent=11 // pred_fallthru
          _
      $region12: #{tpu_custom_call.1} parent=5 // pred_fallthru
        _
      %p84 = scmp.lt.s32.totalorder %s11, 2
      // Predicated region
      $region17: #{tpu_custom_call.1} parent=5 // pred_check
        %p85 = pneg %p84
      $region18: #{tpu_custom_call.1} parent=5 // pred_check_branch
        %87 = sbr.rel (%p85) target = $region20
      $region19: #{tpu_custom_call.1} parent=5 // pred_region
        _
      $region20: #{tpu_custom_call.1} parent=5 // pred_fallthru
        _
      %p88 = scmp.le.s32.totalorder 1, %s11
      %p89 = scmp.lt.s32.totalorder %s11, 3
      %p90 = pnand %p88, %p89
      %p91 = pneg %p90
      // Predicated region
      $region21: #{tpu_custom_call.1} parent=5 // pred_check
        _
      $region22: #{tpu_custom_call.1} parent=5 // pred_check_branch
        %93 = sbr.rel (%p90) target = $region24
      $region23: #{tpu_custom_call.1} parent=5 // pred_region
        %s94 = ssub.s32 %s11, 1
        // Predicated region
        $region25: #{tpu_custom_call.1} parent=23 // pred_check
          %p95 = pneg %p32
        $region26: #{tpu_custom_call.1} parent=23 // pred_check_branch
          %97 = sbr.rel (%p95) target = $region28
        $region27: #{tpu_custom_call.1} parent=23 // pred_region
          %98 = dma.done [#allocation3], 128
        $region28: #{tpu_custom_call.1} parent=23 // pred_fallthru
          _
        %p99 = pneg %p32
        %p100 = pneg %p29
        %p101 = pneg %p58
        %p102 = pneg %p55
        %s103 = sand.u32 %s45, 1
        %s104 = scalar_lea.sflag [#allocation4], %s103
        %s105 = sand.u32 %s45, 1
        %s106 = smul.addr %s105, 8
        %s107 = scalar_lea.vmem [#allocation5], %s106
        %v108 = vld [vmem:[#allocation2] sm:$0xff]
        %109 = vst [vmem:[%s107] sm:$0xff] %v108
        %s110 = sand.u32 %s45, 1
        %s111 = scalar_lea.sflag [#allocation4], %s110
        %s112 = sand.u32 %s45, 1
        %s113 = smul.addr %s112, 8
        %s114 = scalar_lea.vmem [#allocation5], %s113
        // Predicated region
        $region29: #{tpu_custom_call.1} parent=23 // pred_check
          %p115 = pneg %p55
        $region30: #{tpu_custom_call.1} parent=23 // pred_check_branch
          %117 = sbr.rel (%p115) target = $region32
        $region31: #{tpu_custom_call.1} parent=23 // pred_region
          %s119 = ssub.s32 128, 128
          %120 = vsyncadd %s111, %s119
          %s121 = smul.addr %s16, 128
          %s122 = scalar_lea.hbm %s1, %s121
          %s124 = sshll.u32 %s114, 4
          %s125 = int_to_ptr.vmem [resolvable:$true] %s124
          %127 = dma.vmem_to_hbm [thread:$0]  %s125, 128, %s122, %s111
        $region32: #{tpu_custom_call.1} parent=23 // pred_fallthru
          _
      $region24: #{tpu_custom_call.1} parent=5 // pred_fallthru
        _
      %p128 = scmp.le.s32.totalorder 2, %s11
      // Predicated region
      $region33: #{tpu_custom_call.1} parent=5 // pred_check
        %p129 = pneg %p128
      $region34: #{tpu_custom_call.1} parent=5 // pred_check_branch
        %131 = sbr.rel (%p129) target = $region36
      $region35: #{tpu_custom_call.1} parent=5 // pred_region
        %s132 = ssub.s32 %s11, 2
        // Predicated region
        $region37: #{tpu_custom_call.1} parent=35 // pred_check
          %p133 = pneg %p61
        $region38: #{tpu_custom_call.1} parent=35 // pred_check_branch
          %135 = sbr.rel (%p133) target = $region40
        $region39: #{tpu_custom_call.1} parent=35 // pred_region
          %s136 = sand.u32 %s46, 1
          %s137 = scalar_lea.sflag [#allocation4], %s136
          %s138 = sand.u32 %s46, 1
          %s139 = smul.addr %s138, 8
          %s140 = scalar_lea.vmem [#allocation5], %s139
          %141 = dma.done %s137, 128
        $region40: #{tpu_custom_call.1} parent=35 // pred_fallthru
          _
      $region36: #{tpu_custom_call.1} parent=5 // pred_fallthru
        _
    $region6: #{tpu_custom_call.1} parent=1 // loop_footer
      %s15 = sadd.s32 1, %s11
    $region7: #{tpu_custom_call.1} parent=1 // loop_footer_branch
      %10 = sbr.rel target = $region3
    $region8: #{tpu_custom_call.1} parent=1 // loop_exit
      _
    %142 = vsyncpa [#allocation3], 1
    %s143 = scalar_lea.sflag [#allocation3], 1
    %144 = vsyncpa %s143, 1
    %145 = vsyncpa [#allocation4], 1
    %s146 = scalar_lea.sflag [#allocation4], 1
    %147 = vsyncpa %s146, 1

// kernel: _add_norm_impl.1
$region0: #{_add_norm_impl.1}
  #allocation0 [shape = 'u32[]', space=smem, size = 0x4, offset = 0x4, fixed_abs, tag = 'smem constant byte address 0x4 - core index']
  #allocation1 [shape = 'u32[144,128]{1,0:T(1,128)}', space=vmem, size = 0x12000, scoped, tag = 'internal scratch']
  %s0 = inlined_call_operand.hbm [shape: f32[4,8,32], index: 0, kind: input, shape index: {}]
  %s1 = inlined_call_operand.hbm [shape: f32[32,32], index: 1, kind: input, shape index: {}]
  %s2 = inlined_call_operand.vmem [shape: f32[1,32], index: 2, kind: input, shape index: {}]
  %s3 = inlined_call_operand.hbm [shape: f32[4,8,32], index: 3, kind: output, shape index: {}]
  %s4 = sld [smem:[#allocation0]]
  $region53: #{_add_norm_impl.1} parent=0
    _
  %s6 = ssub.s32 1, %s4
  %s7 = scalar_select 0, %s6, %s4
  $region1: #{_add_norm_impl.1} parent=0
    #allocation2 [shape = 'u8[16384]{0}', space=vmem, size = 0x4000, scoped, tag = 'input window, operand 0']
    #allocation3 [shape = 's32[2]{0}', space=sflag, size = 0x8, scoped, tag = 'scoped memory for _add_norm_impl.1']
    #allocation4 [shape = 's32[2]{0}', space=sflag, size = 0x8, scoped, tag = 'scoped memory for _add_norm_impl.1']
    #allocation5 [shape = 'u8[16384]{0}', space=vmem, size = 0x4000, scoped, tag = 'input window, operand 1, single buffered']
    #allocation6 [shape = 's32[1]{0}', space=sflag, size = 0x4, scoped, tag = 'scoped memory for _add_norm_impl.1']
    #allocation7 [shape = 'u8[16384]{0}', space=vmem, size = 0x4000, scoped, tag = 'output window, operand 0']
    %8 = vsyncpa [#allocation3], 0
    %s9 = scalar_lea.sflag [#allocation3], 1
    %10 = vsyncpa %s9, 0
    %11 = vsyncpa [#allocation6], 0
    %12 = vsyncpa [#allocation4], 0
    %s13 = scalar_lea.sflag [#allocation4], 1
    %14 = vsyncpa %s13, 0
    loop: start=0, step=1, limit=4
    $region2: #{_add_norm_impl.1} parent=1 // loop_pre_header
      _
    $region3: #{_add_norm_impl.1} parent=1 // loop_header
      %s16 = sphi 0, %s20
      %p17 = scmp.ge.s32.totalorder %s16, 4
      %s26 = sphi 0, %s28
      %s29 = sphi 0, %s26
      %s30 = sphi 0, %s29
      %s46 = sphi 0, %s30
      %s50 = sphi 0, %s50
      %s52 = sphi 0, %s50
      %s53 = sphi 0, %s52
      %s67 = sphi 0, %s53
      %s71 = sphi 0, %s71
      %s73 = sphi 0, %s71
      %s74 = sphi 0, %s73
      %s88 = sphi 0, %s74
      %s94 = sphi 0, %s96
      %s97 = sphi 0, %s94
      %s98 = sphi 0, %s97
      %s114 = sphi 0, %s98
    $region4: #{_add_norm_impl.1} parent=1 // loop_header_branch
      %19 = sbr.rel (%p17) target = $region8
    $region5: #{_add_norm_impl.1} parent=1 // loop_body
      %s21 = ssub.s32 %s16, 1
      %s22 = ssub.s32 %s16, 2
      %s23 = sadd.s32 %s16, 1
      %s24 = ssub.s32 %s16, %s23
      %p25 = scmp.eq.s32.totalorder %s24, 0
      %s27 = sadd.s32 %s26, 1
      %s28 = scalar_select %p25, %s26, %s27
      %p31 = pneg %p25
      %p32 = scmp.eq.s32.totalorder %s16, 1
      %p33 = por %p31, %p32
      %p34 = scmp.ne.s32.totalorder %s26, %s29
      %p35 = scmp.eq.s32.totalorder %s16, 0
      %p36 = por %p34, %p35
      %p37 = scmp.ne.s32.totalorder %s26, %s29
      %p38 = scmp.eq.s32.totalorder %s21, 1
      %p39 = por %p37, %p38
      %p40 = scmp.ne.s32.totalorder %s29, %s30
      %p41 = scmp.eq.s32.totalorder %s21, 0
      %p42 = por %p40, %p41
      %p43 = scmp.ne.s32.totalorder %s29, %s30
      %p44 = scmp.eq.s32.totalorder %s22, 1
      %p45 = por %p43, %p44
      %p47 = scmp.ne.s32.totalorder %s30, %s46
      %p48 = scmp.eq.s32.totalorder %s22, 0
      %p49 = por %p47, %p48
      %s51 = sadd.s32 %s50, 1
      %p54 = scmp.eq.s32.totalorder %s16, 1
      %p55 = scmp.ne.s32.totalorder %s50, %s52
      %p56 = scmp.eq.s32.totalorder %s16, 0
      %p57 = por %p55, %p56
      %p58 = scmp.ne.s32.totalorder %s50, %s52
      %p59 = scmp.eq.s32.totalorder %s21, 1
      %p60 = por %p58, %p59
      %p61 = scmp.ne.s32.totalorder %s52, %s53
      %p62 = scmp.eq.s32.totalorder %s21, 0
      %p63 = por %p61, %p62
      %p64 = scmp.ne.s32.totalorder %s52, %s53
      %p65 = scmp.eq.s32.totalorder %s22, 1
      %p66 = por %p64, %p65
      %p68 = scmp.ne.s32.totalorder %s53, %s67
      %p69 = scmp.eq.s32.totalorder %s22, 0
      %p70 = por %p68, %p69
      %s72 = sadd.s32 %s71, 1
      %p75 = scmp.eq.s32.totalorder %s16, 1
      %p76 = scmp.ne.s32.totalorder %s71, %s73
      %p77 = scmp.eq.s32.totalorder %s16, 0
      %p78 = por %p76, %p77
      %p79 = scmp.ne.s32.totalorder %s71, %s73
      %p80 = scmp.eq.s32.totalorder %s21, 1
      %p81 = por %p79, %p80
      %p82 = scmp.ne.s32.totalorder %s73, %s74
      %p83 = scmp.eq.s32.totalorder %s21, 0
      %p84 = por %p82, %p83
      %p85 = scmp.ne.s32.totalorder %s73, %s74
      %p86 = scmp.eq.s32.totalorder %s22, 1
      %p87 = por %p85, %p86
      %p89 = scmp.ne.s32.totalorder %s74, %s88
      %p90 = scmp.eq.s32.totalorder %s22, 0
      %p91 = por %p89, %p90
      %s92 = ssub.s32 %s16, %s23
      %p93 = scmp.eq.s32.totalorder %s92, 0
      %s95 = sadd.s32 %s94, 1
      %s96 = scalar_select %p93, %s94, %s95
      %p99 = pneg %p93
      %p100 = scmp.eq.s32.totalorder %s16, 1
      %p101 = por %p99, %p100
      %p102 = scmp.ne.s32.totalorder %s94, %s97
      %p103 = scmp.eq.s32.totalorder %s16, 0
      %p104 = por %p102, %p103
      %p105 = scmp.ne.s32.totalorder %s94, %s97
      %p106 = scmp.eq.s32.totalorder %s21, 1
      %p107 = por %p105, %p106
      %p108 = scmp.ne.s32.totalorder %s97, %s98
      %p109 = scmp.eq.s32.totalorder %s21, 0
      %p110 = por %p108, %p109
      %p111 = scmp.ne.s32.totalorder %s97, %s98
      %p112 = scmp.eq.s32.totalorder %s22, 1
      %p113 = por %p111, %p112
      %p115 = scmp.ne.s32.totalorder %s98, %s114
      %p116 = scmp.eq.s32.totalorder %s22, 0
      %p117 = por %p115, %p116
      %p118 = scmp.le.s32.totalorder 1, %s16
      %p119 = scmp.lt.s32.totalorder %s16, 3
      %p120 = pnand %p118, %p119
      %p121 = pneg %p120
      // Predicated region
      $region9: #{_add_norm_impl.1} parent=5 // pred_check
        _
      $region10: #{_add_norm_impl.1} parent=5 // pred_check_branch
        %123 = sbr.rel (%p120) target = $region12
      $region11: #{_add_norm_impl.1} parent=5 // pred_region
        %s124 = ssub.s32 %s16, 1
        // Predicated region
        $region13: #{_add_norm_impl.1} parent=11 // pred_check
          %p125 = pneg %p63
        $region14: #{_add_norm_impl.1} parent=11 // pred_check_branch
          %127 = sbr.rel (%p125) target = $region16
        $region15: #{_add_norm_impl.1} parent=11 // pred_region
          %s129 = ssub.s32 512, 512
          %130 = vsyncadd [#allocation6], %s129
          %s131 = sshll.u32 [#allocation5], 4
          %s132 = int_to_ptr.vmem [resolvable:$true] %s131
          %137 = dma.hbm_to_vmem [thread:$0]  %s1, 512, %s132, [#allocation6], 128, 128, 8
        $region16: #{_add_norm_impl.1} parent=11 // pred_fallthru
          _
        // Predicated region
        $region17: #{_add_norm_impl.1} parent=11 // pred_check
          %p138 = pneg %p84
        $region18: #{_add_norm_impl.1} parent=11 // pred_check_branch
          %140 = sbr.rel (%p138) target = $region20
        $region19: #{_add_norm_impl.1} parent=11 // pred_region
          _
        $region20: #{_add_norm_impl.1} parent=11 // pred_fallthru
          _
      $region12: #{_add_norm_impl.1} parent=5 // pred_fallthru
        _
      %p141 = scmp.lt.s32.totalorder %s16, 2
      // Predicated region
      $region21: #{_add_norm_impl.1} parent=5 // pred_check
        %p142 = pneg %p141
      $region22: #{_add_norm_impl.1} parent=5 // pred_check_branch
        %144 = sbr.rel (%p142) target = $region24
      $region23: #{_add_norm_impl.1} parent=5 // pred_region
        // Predicated region
        $region25: #{_add_norm_impl.1} parent=23 // pred_check
          %p145 = pneg %p36
        $region26: #{_add_norm_impl.1} parent=23 // pred_check_branch
          %147 = sbr.rel (%p145) target = $region28
        $region27: #{_add_norm_impl.1} parent=23 // pred_region
          %s148 = sand.u32 %s26, 1
          %s149 = scalar_lea.sflag [#allocation3], %s148
          %s150 = sand.u32 %s26, 1
          %s151 = smul.addr %s150, 16
          %s152 = scalar_lea.vmem [#allocation2], %s151
          %s153 = smul.u32 2, %s16
          %s155 = ssub.s32 256, 256
          %156 = vsyncadd %s149, %s155
          %s157 = smul.addr %s153, 128
          %s158 = scalar_lea.hbm %s0, %s157
          %s159 = sshll.u32 %s152, 4
          %s160 = int_to_ptr.vmem [resolvable:$true] %s159
          %165 = dma.hbm_to_vmem [thread:$0]  %s158, 256, %s160, %s149, 128, 128, 8
        $region28: #{_add_norm_impl.1} parent=23 // pred_fallthru
          _
      $region24: #{_add_norm_impl.1} parent=5 // pred_fallthru
        _
      %p166 = scmp.le.s32.totalorder 1, %s16
      %p167 = scmp.lt.s32.totalorder %s16, 3
      %p168 = pnand %p166, %p167
      %p169 = pneg %p168
      // Predicated region
      $region29: #{_add_norm_impl.1} parent=5 // pred_check
        _
      $region30: #{_add_norm_impl.1} parent=5 // pred_check_branch
        %171 = sbr.rel (%p168) target = $region32
      $region31: #{_add_norm_impl.1} parent=5 // pred_region
        %s172 = ssub.s32 %s16, 1
        %s173 = sand.u32 %s29, 1
        %s174 = scalar_lea.sflag [#allocation3], %s173
        %s175 = sand.u32 %s29, 1
        %s176 = smul.addr %s175, 16
        %s177 = scalar_lea.vmem [#allocation2], %s176
        // Predicated region
        $region33: #{_add_norm_impl.1} parent=31 // pred_check
          %p178 = pneg %p42
        $region34: #{_add_norm_impl.1} parent=31 // pred_check_branch
          %180 = sbr.rel (%p178) target = $region36
        $region35: #{_add_norm_impl.1} parent=31 // pred_region
          %181 = dma.done %s174, 256
        $region36: #{_add_norm_impl.1} parent=31 // pred_fallthru
          _
        // Predicated region
        $region37: #{_add_norm_impl.1} parent=31 // pred_check
          %p182 = pneg %p63
        $region38: #{_add_norm_impl.1} parent=31 // pred_check_branch
          %184 = sbr.rel (%p182) target = $region40
        $region39: #{_add_norm_impl.1} parent=31 // pred_region
          %185 = dma.done [#allocation6], 512
        $region40: #{_add_norm_impl.1} parent=31 // pred_fallthru
          _
        %s186 = sand.u32 %s29, 1
        %s187 = scalar_lea.sflag [#allocation3], %s186
        %s188 = sand.u32 %s29, 1
        %s189 = smul.addr %s188, 16
        %s190 = scalar_lea.vmem [#allocation2], %s189
        %p191 = pneg %p42
        %p192 = pneg %p39
        %p193 = pneg %p63
        %p194 = pneg %p60
        %p195 = pneg %p84
        %p196 = pneg %p81
        %p197 = pneg %p110
        %p198 = pneg %p107
        %s199 = sand.u32 %s97, 1
        %s200 = scalar_lea.sflag [#allocation4], %s199
        %s201 = sand.u32 %s97, 1
        %s202 = smul.addr %s201, 16
        %s203 = scalar_lea.vmem [#allocation7], %s202
        %s204 = smul.u32 2, %s21
        %s205 = smul.u32 2, %s21
        %v206 = vld [vmem:[%s177] sm:$0xff]
        %v207 = vld [vmem:[%s177 + $0x8] sm:$0xff]
        %v208 = vld [vmem:[#allocation5] sm:$0xff]
        %v209 = vld [vmem:[#allocation5 + $0x8] sm:$0xff]
        %v210 = vld [vmem:[#allocation5 + $0x10] sm:$0xff]
        %v211 = vld [vmem:[#allocation5 + $0x18] sm:$0xff]
        %v212 = vld [vmem:[%s2] sm:$0x1]
        %v214 = vlaneseq
        %v215 = vshrl.u32 %v214, 7
        %v216 = vsub.s32 0, %v215
        %v217 = vrot.slane %v212, %v216
        %vm219 = vcmask 261120
        %v221 = vsel %vm219, %v206, 0
        %v224 = vsel %vm219, %v207, 0
        %226 = vmatprep.subr.mxu0 0.0
        %227 = vmatpush1.msra.mxu0 %v208
        %228 = vmatprep.subr.mxu0 0.0
        %229 = vmatpush1.msra.mxu0 %v209
        %230 = vmatprep.subr.mxu0 0.0
        %231 = vmatpush1.msra.mxu0 %v210
        %232 = vmatprep.subr.mxu0 0.0
        %233 = vmatpush1.msra.mxu0 %v211
        %234 = vmatprep.subr.mxu0 0.0
        %235 = vmatpush1.msra.mxu0 0.0
        %236 = vmatprep.subr.mxu0 0.0
        %237 = vmatpush1.msra.mxu0 0.0
        %238 = vmatprep.subr.mxu0 0.0
        %239 = vmatpush1.msra.mxu0 0.0
        %240 = vmatprep.subr.mxu0 0.0
        %241 = vmatpush1.msra.mxu0 0.0
        %242 = vmatprep.subr.mxu0 0.0
        %243 = vmatpush1.msra.mxu0 0.0
        %244 = vmatprep.subr.mxu0 0.0
        %245 = vmatpush1.msra.mxu0 0.0
        %246 = vmatprep.subr.mxu0 0.0
        %247 = vmatpush1.msra.mxu0 0.0
        %248 = vmatprep.subr.mxu0 0.0
        %249 = vmatpush1.msra.mxu0 0.0
        %250 = vmatprep.subr.mxu0 0.0
        %251 = vmatpush1.msra.mxu0 0.0
        %252 = vmatprep.subr.mxu0 0.0
        %253 = vmatpush1.msra.mxu0 0.0
        %254 = vmatprep.subr.mxu0 0.0
        %255 = vmatpush1.msra.mxu0 0.0
        %256 = vmatprep.subr.mxu0 0.0
        %257 = vmatpush1.msra.mxu0 0.0
        %258 = vmatprep.subr.mxu0 0.0
        %259 = vmatpush1.msra.mxu0 0.0
        %260 = vmatprep.subr.mxu0 0.0
        %261 = vmatpush1.msra.mxu0 0.0
        %262 = vmatprep.subr.mxu0 0.0
        %263 = vmatpush1.msra.mxu0 0.0
        %264 = vmatprep.subr.mxu0 0.0
        %265 = vmatpush1.msra.mxu0 0.0
        %266 = vmatprep.subr.mxu0 0.0
        %267 = vmatpush1.msra.mxu0 0.0
        %268 = vmatprep.subr.mxu0 0.0
        %269 = vmatpush1.msra.mxu0 0.0
        %270 = vmatprep.subr.mxu0 0.0
        %271 = vmatpush1.msra.mxu0 0.0
        %272 = vmatprep.subr.mxu0 0.0
        %273 = vmatpush1.msra.mxu0 0.0
        %274 = vmatprep.subr.mxu0 0.0
        %275 = vmatpush1.msra.mxu0 0.0
        %276 = vmatprep.subr.mxu0 0.0
        %277 = vmatpush1.msra.mxu0 0.0
        %278 = vmatprep.subr.mxu0 0.0
        %279 = vmatpush1.msra.mxu0 0.0
        %280 = vmatprep.subr.mxu0 0.0
        %281 = vmatpush1.msra.mxu0 0.0
        %282 = vmatprep.subr.mxu0 0.0
        %283 = vmatpush1.msra.mxu0 0.0
        %284 = vmatprep.subr.mxu0 0.0
        %285 = vmatpush1.msra.mxu0 0.0
        %286 = vmatprep.subr.mxu0 0.0
        %287 = vmatpush1.msra.mxu0 0.0
        %288 = vmatprep.subr.mxu0 0.0
        %289 = vmatpush1.msra.mxu0 0.0
        %290 = vmatprep.mubr.f32.mxu0 0.0
        %291 = vmatmul.mubr.f32.gmra.mrb[0].mxu0 %v221
        %v292 = vpop.f32.mrb[0].mxu0
        %v293 = vadd.f32 %v217, %v292
        %v294 = vpop.f32.mrb[0].mxu0
        %295 = vmatprep.mubr.f32.mxu0 0.0
        %296 = vmatmul.mubr.f32.gmra.mrb[0].mxu0 %v224
        %v297 = vpop.f32.mrb[0].mxu0
        %v298 = vadd.f32 %v217, %v297
        %v299 = vpop.f32.mrb[0].mxu0
        %300 = vdwg.mxu0
        %v301 = vadd.f32 %v206, %v293
        %v302 = vadd.f32 %v207, %v298
        %v303 = vsel %vm219, %v301, 0.0
        %304 = vadd.xlane.f32.xlu0 %v303
        %v305 = vpop.xlane.xlu0 %304
        %v306 = vsel %vm219, %v302, 0.0
        %307 = vadd.xlane.f32.xlu0 %v306
        %v308 = vpop.xlane.xlu0 %307
        %v309 = vrot.slane %v305, 4
        %v310 = vadd.f32 %v305, %v309
        %v311 = vrot.slane %v310, 2
        %v312 = vadd.f32 %v310, %v311
        %v313 = vrot.slane %v312, 1
        %v314 = vadd.f32 %v312, %v313
        %v315 = vrot.slane %v308, 4
        %v316 = vadd.f32 %v308, %v315
        %v317 = vrot.slane %v316, 2
        %v318 = vadd.f32 %v316, %v317
        %v319 = vrot.slane %v318, 1
        %v320 = vadd.f32 %v318, %v319
        %v321 = vrcp.pop 256.0
        %v322 = vmul.f32 %v314, %v321
        %v323 = vmul.f32 %v320, %v321
        %v324 = vsub.f32 %v301, %v322
        %v325 = vsub.f32 %v302, %v323
        %v326 = vmul.f32 %v324, %v324
        %v327 = vmul.f32 %v325, %v325
        %v328 = vsel %vm219, %v326, 0.0
        %329 = vadd.xlane.f32.xlu0 %v328
        %v330 = vpop.xlane.xlu0 %329
        %v331 = vsel %vm219, %v327, 0.0
        %332 = vadd.xlane.f32.xlu0 %v331
        %v333 = vpop.xlane.xlu0 %332
        %v334 = vrot.slane %v330, 4
        %v335 = vadd.f32 %v330, %v334
        %v336 = vrot.slane %v335, 2
        %v337 = vadd.f32 %v335, %v336
        %v338 = vrot.slane %v337, 1
        %v339 = vadd.f32 %v337, %v338
        %v340 = vrot.slane %v333, 4
        %v341 = vadd.f32 %v333, %v340
        %v342 = vrot.slane %v341, 2
        %v343 = vadd.f32 %v341, %v342
        %v344 = vrot.slane %v343, 1
        %v345 = vadd.f32 %v343, %v344
        %v346 = vmul.f32 %v339, %v321
        %v347 = vmul.f32 %v345, %v321
        %v348 = vadd.f32 %v346, 1e-05
        %v349 = vadd.f32 %v347, 1e-05
        %v350 = vrsqrt.pop %v348
        %v351 = vrsqrt.pop %v349
        %v352 = vmul.f32 %v324, %v350
        %v353 = vmul.f32 %v325, %v351
        %354 = vst.msk [vmem:[%s203] sm:$0xff] %vm219, %v352
        %355 = vst.msk [vmem:[%s203 + $0x8] sm:$0xff] %vm219, %v353
        %s356 = sand.u32 %s97, 1
        %s357 = scalar_lea.sflag [#allocation4], %s356
        %s358 = sand.u32 %s97, 1
        %s359 = smul.addr %s358, 16
        %s360 = scalar_lea.vmem [#allocation7], %s359
        // Predicated region
        $region41: #{_add_norm_impl.1} parent=31 // pred_check
          %p361 = pneg %p107
        $region42: #{_add_norm_impl.1} parent=31 // pred_check_branch
          %363 = sbr.rel (%p361) target = $region44
        $region43: #{_add_norm_impl.1} parent=31 // pred_region
          %s364 = smul.u32 2, %s21
          %s366 = ssub.s32 256, 256
          %367 = vsyncadd %s357, %s366
          %s368 = smul.addr %s364, 128
          %s369 = scalar_lea.hbm %s3, %s368
          %s370 = sshll.u32 %s360, 4
          %s371 = int_to_ptr.vmem [resolvable:$true] %s370
          %376 = dma.vmem_to_hbm [thread:$0]  %s371, 256, %s369, %s357, 128, 128, 8
        $region44: #{_add_norm_impl.1} parent=31 // pred_fallthru
          _
      $region32: #{_add_norm_impl.1} parent=5 // pred_fallthru
        _
      %p377 = scmp.le.s32.totalorder 2, %s16
      // Predicated region
      $region45: #{_add_norm_impl.1} parent=5 // pred_check
        %p378 = pneg %p377
      $region46: #{_add_norm_impl.1} parent=5 // pred_check_branch
        %380 = sbr.rel (%p378) target = $region48
      $region47: #{_add_norm_impl.1} parent=5 // pred_region
        %s381 = ssub.s32 %s16, 2
        // Predicated region
        $region49: #{_add_norm_impl.1} parent=47 // pred_check
          %p382 = pneg %p113
        $region50: #{_add_norm_impl.1} parent=47 // pred_check_branch
          %384 = sbr.rel (%p382) target = $region52
        $region51: #{_add_norm_impl.1} parent=47 // pred_region
          %s385 = sand.u32 %s98, 1
          %s386 = scalar_lea.sflag [#allocation4], %s385
          %s387 = sand.u32 %s98, 1
          %s388 = smul.addr %s387, 16
          %s389 = scalar_lea.vmem [#allocation7], %s388
          %390 = dma.done %s386, 256
        $region52: #{_add_norm_impl.1} parent=47 // pred_fallthru
          _
      $region48: #{_add_norm_impl.1} parent=5 // pred_fallthru
        _
    $region6: #{_add_norm_impl.1} parent=1 // loop_footer
      %s20 = sadd.s32 1, %s16
    $region7: #{_add_norm_impl.1} parent=1 // loop_footer_branch
      %15 = sbr.rel target = $region3
    $region8: #{_add_norm_impl.1} parent=1 // loop_exit
      _
    %391 = vsyncpa [#allocation3], 1
    %s392 = scalar_lea.sflag [#allocation3], 1
    %393 = vsyncpa %s392, 1
    %394 = vsyncpa [#allocation6], 1
    %395 = vsyncpa [#allocation4], 1
    %s396 = scalar_lea.sflag [#allocation4], 1
    %397 = vsyncpa %s396, 1

</llo_original>
